<compile_context>
chip_gen: v7x
topology: tpu7x:2x2x1
jax: 0.10.0
libtpu: 0.0.40
codegen_flags: <defaults>
</compile_context>

<pallas_src>
import functools

import jax
import jax.numpy as jnp
from jax.experimental import pallas as pl
from jax.experimental.pallas import tpu as pltpu

LANE = 128


def _round_up(n, m):
    return ((n + m - 1) // m) * m


def actor_kernel(x_ref, w1_ref, b1_ref, w2_ref, b2_ref, w3_ref, b3_ref, o_ref):
    # fc1 + ReLU   (bf16 MXU matmul, f32 accumulate + f32 epilogue)
    x = x_ref[...].astype(jnp.bfloat16)
    h1 = jnp.dot(x, w1_ref[...], preferred_element_type=jnp.float32)
    h1 = jnp.maximum(h1 + b1_ref[...], 0.0)
    # fc2 + ReLU
    h2 = jnp.dot(h1.astype(jnp.bfloat16), w2_ref[...],
                 preferred_element_type=jnp.float32)
    h2 = jnp.maximum(h2 + b2_ref[...], 0.0)
    # fc3 + Tanh   (output block is lane-dense: padded to 128 columns)
    h3 = jnp.dot(h2.astype(jnp.bfloat16), w3_ref[...],
                 preferred_element_type=jnp.float32)
    o_ref[...] = jnp.tanh(h3 + b3_ref[...])


def prepare_params(w1, b1, w2, b2, w3, b3):
    """Zero-pad feature dims to multiples of 128 (exact) and cast W to bf16.

    Call once; the padded params are what actor_forward expects.
    """
    S, H1 = w1.shape
    H2 = w2.shape[1]
    A = w3.shape[1]
    H1p, H2p, Ap = _round_up(H1, LANE), _round_up(H2, LANE), _round_up(A, LANE)

    w1p = jnp.zeros((S, H1p), jnp.float32).at[:, :H1].set(w1).astype(jnp.bfloat16)
    b1p = jnp.zeros((1, H1p), jnp.float32).at[:, :H1].set(b1)
    w2p = jnp.zeros((H1p, H2p), jnp.float32).at[:H1, :H2].set(w2).astype(jnp.bfloat16)
    b2p = jnp.zeros((1, H2p), jnp.float32).at[:, :H2].set(b2)
    w3p = jnp.zeros((H2p, Ap), jnp.float32).at[:H2, :A].set(w3).astype(jnp.bfloat16)
    b3p = jnp.zeros((1, Ap), jnp.float32).at[:, :A].set(b3)
    return w1p, b1p, w2p, b2p, w3p, b3p


@functools.partial(jax.jit, static_argnames=("action_dim", "tm"))
def actor_forward(x, w1, b1, w2, b2, w3, b3, *, action_dim, tm=128):
    """x: (B, state_dim) f32; padded params from prepare_params()."""
    B, S = x.shape
    H1p = w1.shape[1]
    H2p = w2.shape[1]
    Ap = w3.shape[1]

    # Batch tile: never larger than the (8-padded) batch, so small batches run
    # as a single grid step; large batches get full-MXU-row tiles and a
    # "parallel" grid (shardable across v7x's two TensorCores).
    tm_eff = min(tm, _round_up(B, 8))
    Bp = _round_up(B, tm_eff)
    if Bp != B:
        x = jnp.pad(x, ((0, Bp - B), (0, 0)))

    out = pl.pallas_call(
        actor_kernel,
        out_shape=jax.ShapeDtypeStruct((Bp, Ap), jnp.float32),
        grid=(Bp // tm_eff,),
        in_specs=[
            pl.BlockSpec((tm_eff, S), lambda i: (i, 0)),  # x tile
            pl.BlockSpec((S, H1p), lambda i: (0, 0)),     # W1 (resident, bf16)
            pl.BlockSpec((1, H1p), lambda i: (0, 0)),     # b1 (f32)
            pl.BlockSpec((H1p, H2p), lambda i: (0, 0)),   # W2 (resident, bf16)
            pl.BlockSpec((1, H2p), lambda i: (0, 0)),     # b2 (f32)
            pl.BlockSpec((H2p, Ap), lambda i: (0, 0)),    # W3 (resident, bf16)
            pl.BlockSpec((1, Ap), lambda i: (0, 0)),      # b3 (f32)
        ],
        out_specs=pl.BlockSpec((tm_eff, Ap), lambda i: (i, 0)),
        compiler_params=pltpu.CompilerParams(
            dimension_semantics=("parallel",)),
    )(x, w1, b1, w2, b2, w3, b3)
    # Drop padded batch rows and padded (exactly-zero) action columns.
    return out[:B, :action_dim]


def init_params(key, state_dim=8, action_dim=2, hidden_dim=(400, 300)):
    """Deterministic synthetic init mimicking nn.Linear's U(-1/sqrt(fan_in), ...)."""
    dims = [(state_dim, hidden_dim[0]),
            (hidden_dim[0], hidden_dim[1]),
            (hidden_dim[1], action_dim)]
    params = []
    for fan_in, fan_out in dims:
        key, kw, kb = jax.random.split(key, 3)
        bound = 1.0 / jnp.sqrt(float(fan_in))
        w = jax.random.uniform(kw, (fan_in, fan_out), jnp.float32, -bound, bound)
        b = jax.random.uniform(kb, (1, fan_out), jnp.float32, -bound, bound)
        params += [w, b]
    return params


def actor_ref_f32(x, w1, b1, w2, b2, w3, b3):
    h1 = jnp.maximum(x @ w1 + b1, 0.0)
    h2 = jnp.maximum(h1 @ w2 + b2, 0.0)
    return jnp.tanh(h2 @ w3 + b3)


def actor_ref_matched(x, w1, b1, w2, b2, w3, b3):
    """Reference that mirrors the kernel's bf16-multiply / f32-accumulate path."""
    bf = lambda a: a.astype(jnp.bfloat16).astype(jnp.float32)
    h1 = jnp.maximum(bf(x) @ bf(w1) + b1, 0.0)
    h2 = jnp.maximum(bf(h1) @ bf(w2) + b2, 0.0)
    return jnp.tanh(bf(h2) @ bf(w3) + b3)


if __name__ == "__main__":
    key = jax.random.PRNGKey(0)
    key, kx = jax.random.split(key)

    batch, state_dim, action_dim = 2, 8, 2
    x = jax.random.normal(kx, (batch, state_dim), jnp.float32)

    params = init_params(key, state_dim=state_dim, action_dim=action_dim,
                         hidden_dim=(400, 300))
    padded = prepare_params(*params)

    out = actor_forward(x, *padded, action_dim=action_dim)
    out = jax.block_until_ready(out)
    assert out.shape == (batch, action_dim)

    # Tight check against a reference with identical bf16/f32 numerics.
    ref_matched = actor_ref_matched(x, *params)
    assert jnp.allclose(out, ref_matched, atol=1e-3, rtol=1e-3), \
        "mismatch vs matched (bf16-matmul) reference"

    # Loose check against the pure-f32 PyTorch-equivalent forward.
    ref_f32 = actor_ref_f32(x, *params)
    assert jnp.allclose(out, ref_f32, atol=5e-2, rtol=5e-2), \
        "mismatch vs f32 reference"

    print("KERNEL_OK")
</pallas_src>

<mosaic_0001>
module attributes {stable_mosaic.version = 11 : i64} {
  func.func @actor_kernel(%arg0: i32, %arg1: memref<8x8xf32, #tpu.memory_space<vmem>>, %arg2: memref<8x512xbf16, #tpu.memory_space<vmem>>, %arg3: memref<1x512xf32, #tpu.memory_space<vmem>>, %arg4: memref<512x384xbf16, #tpu.memory_space<vmem>>, %arg5: memref<1x384xf32, #tpu.memory_space<vmem>>, %arg6: memref<384x128xbf16, #tpu.memory_space<vmem>>, %arg7: memref<1x128xf32, #tpu.memory_space<vmem>>, %arg8: memref<8x128xf32, #tpu.memory_space<vmem>>) attributes {dimension_semantics = [#tpu.dimension_semantics<parallel>], iteration_bounds = array<i64: 1>, scalar_prefetch = 0 : i64, scratch_operands = 0 : i64, tpu.core_type = #tpu.core_type<tc>, window_params = [{transform_indices = @transform_0, window_bounds = array<i64: 8, 8>}, {pipeline_mode = #tpu.pipeline_mode<synchronous>, transform_indices = @transform_1, window_bounds = array<i64: 8, 512>}, {pipeline_mode = #tpu.pipeline_mode<synchronous>, transform_indices = @transform_2, window_bounds = array<i64: 1, 512>}, {pipeline_mode = #tpu.pipeline_mode<synchronous>, transform_indices = @transform_3, window_bounds = array<i64: 512, 384>}, {pipeline_mode = #tpu.pipeline_mode<synchronous>, transform_indices = @transform_4, window_bounds = array<i64: 1, 384>}, {pipeline_mode = #tpu.pipeline_mode<synchronous>, transform_indices = @transform_5, window_bounds = array<i64: 384, 128>}, {pipeline_mode = #tpu.pipeline_mode<synchronous>, transform_indices = @transform_6, window_bounds = array<i64: 1, 128>}, {transform_indices = @transform_7, window_bounds = array<i64: 8, 128>}]} {
    %c0 = arith.constant 0 : index
    %c0_0 = arith.constant 0 : index
    %0 = vector.load %arg1[%c0, %c0_0] : memref<8x8xf32, #tpu.memory_space<vmem>>, vector<8x8xf32>
    %1 = arith.truncf %0 : vector<8x8xf32> to vector<8x8xbf16>
    %c0_1 = arith.constant 0 : index
    %c0_2 = arith.constant 0 : index
    %2 = vector.load %arg2[%c0_1, %c0_2] : memref<8x512xbf16, #tpu.memory_space<vmem>>, vector<8x512xbf16>
    %cst = arith.constant dense<0.000000e+00> : vector<8x512xf32>
    %3 = tpu.matmul %1, %2, %cst {dimension_numbers = #tpu.dot_dimension_numbers<[1], [0], [0], [1], [0, 0, 1, 1], [], []>} : vector<8x8xbf16>, vector<8x512xbf16>, vector<8x512xf32> -> vector<8x512xf32>
    %c0_3 = arith.constant 0 : index
    %c0_4 = arith.constant 0 : index
    %4 = vector.load %arg3[%c0_3, %c0_4] : memref<1x512xf32, #tpu.memory_space<vmem>>, vector<1x512xf32>
    %5 = vector.broadcast %4 : vector<1x512xf32> to vector<8x512xf32>
    %6 = arith.addf %3, %5 : vector<8x512xf32>
    %cst_5 = arith.constant 0.000000e+00 : f32
    %7 = vector.broadcast %cst_5 : f32 to vector<8x512xf32>
    %8 = arith.maximumf %6, %7 : vector<8x512xf32>
    %9 = arith.truncf %8 : vector<8x512xf32> to vector<8x512xbf16>
    %c0_6 = arith.constant 0 : index
    %c0_7 = arith.constant 0 : index
    %10 = vector.load %arg4[%c0_6, %c0_7] : memref<512x384xbf16, #tpu.memory_space<vmem>>, vector<512x384xbf16>
    %cst_8 = arith.constant dense<0.000000e+00> : vector<8x384xf32>
    %11 = tpu.matmul %9, %10, %cst_8 {dimension_numbers = #tpu.dot_dimension_numbers<[1], [0], [0], [1], [0, 0, 1, 1], [], []>} : vector<8x512xbf16>, vector<512x384xbf16>, vector<8x384xf32> -> vector<8x384xf32>
    %c0_9 = arith.constant 0 : index
    %c0_10 = arith.constant 0 : index
    %12 = vector.load %arg5[%c0_9, %c0_10] : memref<1x384xf32, #tpu.memory_space<vmem>>, vector<1x384xf32>
    %13 = vector.broadcast %12 : vector<1x384xf32> to vector<8x384xf32>
    %14 = arith.addf %11, %13 : vector<8x384xf32>
    %cst_11 = arith.constant 0.000000e+00 : f32
    %15 = vector.broadcast %cst_11 : f32 to vector<8x384xf32>
    %16 = arith.maximumf %14, %15 : vector<8x384xf32>
    %17 = arith.truncf %16 : vector<8x384xf32> to vector<8x384xbf16>
    %c0_12 = arith.constant 0 : index
    %c0_13 = arith.constant 0 : index
    %18 = vector.load %arg6[%c0_12, %c0_13] : memref<384x128xbf16, #tpu.memory_space<vmem>>, vector<384x128xbf16>
    %cst_14 = arith.constant dense<0.000000e+00> : vector<8x128xf32>
    %19 = tpu.matmul %17, %18, %cst_14 {dimension_numbers = #tpu.dot_dimension_numbers<[1], [0], [0], [1], [0, 0, 1, 1], [], []>} : vector<8x384xbf16>, vector<384x128xbf16>, vector<8x128xf32> -> vector<8x128xf32>
    %c0_15 = arith.constant 0 : index
    %c0_16 = arith.constant 0 : index
    %20 = vector.load %arg7[%c0_15, %c0_16] : memref<1x128xf32, #tpu.memory_space<vmem>>, vector<1x128xf32>
    %21 = vector.broadcast %20 : vector<1x128xf32> to vector<8x128xf32>
    %22 = arith.addf %19, %21 : vector<8x128xf32>
    %23 = math.tanh %22 : vector<8x128xf32>
    %c0_17 = arith.constant 0 : index
    %c0_18 = arith.constant 0 : index
    %24 = vector.load %arg8[%c0_17, %c0_18] : memref<8x128xf32, #tpu.memory_space<vmem>>, vector<8x128xf32>
    tpu.vector_store %arg8[%c0_17, %c0_18], %23 {strides = array<i32>} : memref<8x128xf32, #tpu.memory_space<vmem>>, vector<8x128xf32>,
    return
  }
  func.func @transform_0(%arg0: i32) -> (i32, i32) {
    %c0_i32 = arith.constant 0 : i32
    %c0_i32_0 = arith.constant 0 : i32
    return %arg0, %c0_i32 : i32, i32
  }
  func.func @transform_1(%arg0: i32) -> (i32, i32) {
    %c0_i32 = arith.constant 0 : i32
    %c0_i32_0 = arith.constant 0 : i32
    %c0_i32_1 = arith.constant 0 : i32
    return %c0_i32, %c0_i32_0 : i32, i32
  }
  func.func @transform_2(%arg0: i32) -> (i32, i32) {
    %c0_i32 = arith.constant 0 : i32
    %c0_i32_0 = arith.constant 0 : i32
    %c0_i32_1 = arith.constant 0 : i32
    return %c0_i32, %c0_i32_0 : i32, i32
  }
  func.func @transform_3(%arg0: i32) -> (i32, i32) {
    %c0_i32 = arith.constant 0 : i32
    %c0_i32_0 = arith.constant 0 : i32
    %c0_i32_1 = arith.constant 0 : i32
    return %c0_i32, %c0_i32_0 : i32, i32
  }
  func.func @transform_4(%arg0: i32) -> (i32, i32) {
    %c0_i32 = arith.constant 0 : i32
    %c0_i32_0 = arith.constant 0 : i32
    %c0_i32_1 = arith.constant 0 : i32
    return %c0_i32, %c0_i32_0 : i32, i32
  }
  func.func @transform_5(%arg0: i32) -> (i32, i32) {
    %c0_i32 = arith.constant 0 : i32
    %c0_i32_0 = arith.constant 0 : i32
    %c0_i32_1 = arith.constant 0 : i32
    return %c0_i32, %c0_i32_0 : i32, i32
  }
  func.func @transform_6(%arg0: i32) -> (i32, i32) {
    %c0_i32 = arith.constant 0 : i32
    %c0_i32_0 = arith.constant 0 : i32
    %c0_i32_1 = arith.constant 0 : i32
    return %c0_i32, %c0_i32_0 : i32, i32
  }
  func.func @transform_7(%arg0: i32) -> (i32, i32) {
    %c0_i32 = arith.constant 0 : i32
    %c0_i32_0 = arith.constant 0 : i32
    return %arg0, %c0_i32 : i32, i32
  }
}

</mosaic_0001>

<llo_original>
// kernel: actor_forward.1
$region0: #{actor_forward.1}
  #allocation0 [shape = 'u32[]', space=smem, size = 0x4, offset = 0x4, fixed_abs, tag = 'smem constant byte address 0x4 - core index']
  #allocation1 [shape = 'u32[144,128]{1,0:T(1,128)}', space=vmem, size = 0x12000, scoped, tag = 'internal scratch']
  %s0 = inlined_call_operand.vmem [shape: f32[8,8], index: 0, kind: input, shape index: {}]
  %s1 = inlined_call_operand.hbm [shape: bf16[8,512], index: 1, kind: input, shape index: {}]
  %s2 = inlined_call_operand.vmem [shape: f32[1,512], index: 2, kind: input, shape index: {}]
  %s3 = inlined_call_operand.hbm [shape: bf16[512,384], index: 3, kind: input, shape index: {}]
  %s4 = inlined_call_operand.vmem [shape: f32[1,384], index: 4, kind: input, shape index: {}]
  %s5 = inlined_call_operand.hbm [shape: bf16[384,128], index: 5, kind: input, shape index: {}]
  %s6 = inlined_call_operand.vmem [shape: f32[1,128], index: 6, kind: input, shape index: {}]
  %s7 = inlined_call_operand.vmem [shape: f32[8,128], index: 7, kind: output, shape index: {}]
  %s8 = sld [smem:[#allocation0]]
  $region50: #{actor_forward.1} parent=0
    _
  %s10 = ssub.s32 1, %s8
  %s11 = scalar_select 0, %s10, %s8
  $region1: #{actor_forward.1} parent=0
    #allocation2 [shape = 'u8[8192]{0}', space=vmem, size = 0x2000, scoped, tag = 'input window, operand 1, single buffered']
    #allocation3 [shape = 's32[1]{0}', space=sflag, size = 0x4, scoped, tag = 'scoped memory for actor_forward.1']
    #allocation4 [shape = 'u8[393216]{0}', space=vmem, size = 0x60000, scoped, tag = 'input window, operand 3, single buffered']
    #allocation5 [shape = 's32[1]{0}', space=sflag, size = 0x4, scoped, tag = 'scoped memory for actor_forward.1']
    #allocation6 [shape = 'u8[98304]{0}', space=vmem, size = 0x18000, scoped, tag = 'input window, operand 5, single buffered']
    %12 = vsyncpa [#allocation3], 0
    %13 = vsyncpa [#allocation5], 0
    // Predicated region
    $region2: #{actor_forward.1} parent=1 // pred_check
      _
    $region3: #{actor_forward.1} parent=1 // pred_check_branch
      %15 = sbr.rel (0) target = $region5
    $region4: #{actor_forward.1} parent=1 // pred_region
      _
    $region5: #{actor_forward.1} parent=1 // pred_fallthru
      _
    // Predicated region
    $region6: #{actor_forward.1} parent=1 // pred_check
      _
    $region7: #{actor_forward.1} parent=1 // pred_check_branch
      %17 = sbr.rel (0) target = $region9
    $region8: #{actor_forward.1} parent=1 // pred_region
      %s19 = ssub.s32 256, 256
      %20 = vsyncadd [#allocation3], %s19
      %s22 = sshll.u32 [#allocation2], 4
      %s23 = int_to_ptr.vmem [resolvable:$true] %s22
      %25 = dma.hbm_to_vmem [thread:$0]  %s1, 256, %s23, [#allocation3]
    $region9: #{actor_forward.1} parent=1 // pred_fallthru
      _
    // Predicated region
    $region10: #{actor_forward.1} parent=1 // pred_check
      _
    $region11: #{actor_forward.1} parent=1 // pred_check_branch
      %27 = sbr.rel (0) target = $region13
    $region12: #{actor_forward.1} parent=1 // pred_region
      _
    $region13: #{actor_forward.1} parent=1 // pred_fallthru
      _
    // Predicated region
    $region14: #{actor_forward.1} parent=1 // pred_check
      _
    $region15: #{actor_forward.1} parent=1 // pred_check_branch
      %29 = sbr.rel (0) target = $region17
    $region16: #{actor_forward.1} parent=1 // pred_region
      %s31 = ssub.s32 12288, 12288
      %32 = vsyncadd [#allocation5], %s31
      %s33 = sshll.u32 [#allocation4], 4
      %s34 = int_to_ptr.vmem [resolvable:$true] %s33
      %39 = dma.hbm_to_vmem [thread:$0]  %s3, 12288, %s34, [#allocation5], 192, 192, 12
    $region17: #{actor_forward.1} parent=1 // pred_fallthru
      _
    // Predicated region
    $region18: #{actor_forward.1} parent=1 // pred_check
      _
    $region19: #{actor_forward.1} parent=1 // pred_check_branch
      %41 = sbr.rel (0) target = $region21
    $region20: #{actor_forward.1} parent=1 // pred_region
      _
    $region21: #{actor_forward.1} parent=1 // pred_fallthru
      _
    // Predicated region
    $region22: #{actor_forward.1} parent=1 // pred_check
      _
    $region23: #{actor_forward.1} parent=1 // pred_check_branch
      %43 = sbr.rel (0) target = $region25
    $region24: #{actor_forward.1} parent=1 // pred_region
      %s45 = ssub.s32 3072, 3072
      %46 = vsyncadd [#allocation5], %s45
      %s47 = sshll.u32 [#allocation6], 4
      %s48 = int_to_ptr.vmem [resolvable:$true] %s47
      %53 = dma.hbm_to_vmem [thread:$0]  %s5, 3072, %s48, [#allocation5], 64, 64, 4
    $region25: #{actor_forward.1} parent=1 // pred_fallthru
      _
    // Predicated region
    $region26: #{actor_forward.1} parent=1 // pred_check
      _
    $region27: #{actor_forward.1} parent=1 // pred_check_branch
      %55 = sbr.rel (0) target = $region29
    $region28: #{actor_forward.1} parent=1 // pred_region
      _
    $region29: #{actor_forward.1} parent=1 // pred_fallthru
      _
    // Predicated region
    $region30: #{actor_forward.1} parent=1 // pred_check
      _
    $region31: #{actor_forward.1} parent=1 // pred_check_branch
      %57 = sbr.rel (0) target = $region33
    $region32: #{actor_forward.1} parent=1 // pred_region
      %58 = dma.done [#allocation3], 256
    $region33: #{actor_forward.1} parent=1 // pred_fallthru
      _
    // Predicated region
    $region34: #{actor_forward.1} parent=1 // pred_check
      _
    $region35: #{actor_forward.1} parent=1 // pred_check_branch
      %60 = sbr.rel (0) target = $region37
    $region36: #{actor_forward.1} parent=1 // pred_region
      %61 = dma.done [#allocation5], 12288
    $region37: #{actor_forward.1} parent=1 // pred_fallthru
      _
    // Predicated region
    $region38: #{actor_forward.1} parent=1 // pred_check
      _
    $region39: #{actor_forward.1} parent=1 // pred_check_branch
      %63 = sbr.rel (0) target = $region41
    $region40: #{actor_forward.1} parent=1 // pred_region
      %64 = dma.done [#allocation5], 3072
    $region41: #{actor_forward.1} parent=1 // pred_fallthru
      _
    %v66 = vld [vmem:[%s0] sm:$0xff]
    %v67 = vpack.c.bf16 %v66, %v66
    %v68 = vld [vmem:[#allocation2] sm:$0xff]
    %v69 = vld [vmem:[#allocation2 + $0x8] sm:$0xff]
    %v70 = vld [vmem:[%s2] sm:$0xf]
    %v72 = vlaneseq
    %v73 = vshrl.u32 %v72, 7
    %v74 = vsub.s32 0, %v73
    %v75 = vrot.slane %v70, %v74
    %v76 = vlaneseq
    %v77 = vshrl.u32 %v76, 7
    %v78 = vsub.s32 1, %v77
    %v79 = vrot.slane %v70, %v78
    %v80 = vlaneseq
    %v81 = vshrl.u32 %v80, 7
    %v82 = vsub.s32 2, %v81
    %v83 = vrot.slane %v70, %v82
    %v84 = vlaneseq
    %v85 = vshrl.u32 %v84, 7
    %v86 = vsub.s32 3, %v85
    %v87 = vrot.slane %v70, %v86
    %v94 = vunpack.c.l.b16 %v68
    %v95 = vunpack.c.h.b16 %v68
    %v96 = vunpack.c.l.b16 %v69
    %v97 = vunpack.c.h.b16 %v69
    %v98 = vpack.c.b16 %v94, %v94
    %v99 = vpack.c.b16 %v95, %v95
    %v100 = vpack.c.b16 %v96, %v96
    %v101 = vpack.c.b16 %v97, %v97
    %vm102 = vcmask 64512
    %v104 = vsel %vm102, %v67, 0
    %vm106 = vcmask 1043456
    %v108 = vsel %vm106, %v98, 0
    %v111 = vsel %vm106, %v99, 0
    %v114 = vsel %vm106, %v100, 0
    %v117 = vsel %vm106, %v101, 0
    %119 = vmatprep.subr.bf16.mxu0 %v111
    %120 = vmatpush1.bf16.msra.mxu0 %v108
    %121 = vmatprep.subr.bf16.mxu0 0
    %122 = vmatpush1.bf16.msra.mxu0 0
    %123 = vmatprep.subr.bf16.mxu0 0
    %124 = vmatpush1.bf16.msra.mxu0 0
    %125 = vmatprep.subr.bf16.mxu0 0
    %126 = vmatpush1.bf16.msra.mxu0 0
    %127 = vmatprep.subr.bf16.mxu0 0
    %128 = vmatpush1.bf16.msra.mxu0 0
    %129 = vmatprep.subr.bf16.mxu0 0
    %130 = vmatpush1.bf16.msra.mxu0 0
    %131 = vmatprep.subr.bf16.mxu0 0
    %132 = vmatpush1.bf16.msra.mxu0 0
    %133 = vmatprep.subr.bf16.mxu0 0
    %134 = vmatpush1.bf16.msra.mxu0 0
    %135 = vmatprep.subr.bf16.mxu0 0
    %136 = vmatpush1.bf16.msra.mxu0 0
    %137 = vmatprep.subr.bf16.mxu0 0
    %138 = vmatpush1.bf16.msra.mxu0 0
    %139 = vmatprep.subr.bf16.mxu0 0
    %140 = vmatpush1.bf16.msra.mxu0 0
    %141 = vmatprep.subr.bf16.mxu0 0
    %142 = vmatpush1.bf16.msra.mxu0 0
    %143 = vmatprep.subr.bf16.mxu0 0
    %144 = vmatpush1.bf16.msra.mxu0 0
    %145 = vmatprep.subr.bf16.mxu0 0
    %146 = vmatpush1.bf16.msra.mxu0 0
    %147 = vmatprep.subr.bf16.mxu0 0
    %148 = vmatpush1.bf16.msra.mxu0 0
    %149 = vmatprep.subr.bf16.mxu0 0
    %150 = vmatpush1.bf16.msra.mxu0 0
    %151 = vmatprep.mubr.bf16.mxu0 0
    %152 = vmatmul.mubr.bf16.gmra.mrb[0].mxu0 %v104
    %v153 = vpop.f32.mrb[0].mxu0
    %v154 = vadd.f32 %v75, %v153
    %v155 = vpop.f32.mrb[0].mxu0
    %v156 = vadd.f32 %v79, %v155
    %v157 = vpop.f32.mrb[0].mxu0
    %v158 = vpop.f32.mrb[0].mxu0
    %159 = vdwg.mxu0
    %160 = vmatprep.subr.bf16.mxu0 %v117
    %161 = vmatpush1.bf16.msra.mxu0 %v114
    %162 = vmatprep.subr.bf16.mxu0 0
    %163 = vmatpush1.bf16.msra.mxu0 0
    %164 = vmatprep.subr.bf16.mxu0 0
    %165 = vmatpush1.bf16.msra.mxu0 0
    %166 = vmatprep.subr.bf16.mxu0 0
    %167 = vmatpush1.bf16.msra.mxu0 0
    %168 = vmatprep.subr.bf16.mxu0 0
    %169 = vmatpush1.bf16.msra.mxu0 0
    %170 = vmatprep.subr.bf16.mxu0 0
    %171 = vmatpush1.bf16.msra.mxu0 0
    %172 = vmatprep.subr.bf16.mxu0 0
    %173 = vmatpush1.bf16.msra.mxu0 0
    %174 = vmatprep.subr.bf16.mxu0 0
    %175 = vmatpush1.bf16.msra.mxu0 0
    %176 = vmatprep.subr.bf16.mxu0 0
    %177 = vmatpush1.bf16.msra.mxu0 0
    %178 = vmatprep.subr.bf16.mxu0 0
    %179 = vmatpush1.bf16.msra.mxu0 0
    %180 = vmatprep.subr.bf16.mxu0 0
    %181 = vmatpush1.bf16.msra.mxu0 0
    %182 = vmatprep.subr.bf16.mxu0 0
    %183 = vmatpush1.bf16.msra.mxu0 0
    %184 = vmatprep.subr.bf16.mxu0 0
    %185 = vmatpush1.bf16.msra.mxu0 0
    %186 = vmatprep.subr.bf16.mxu0 0
    %187 = vmatpush1.bf16.msra.mxu0 0
    %188 = vmatprep.subr.bf16.mxu0 0
    %189 = vmatpush1.bf16.msra.mxu0 0
    %190 = vmatprep.subr.bf16.mxu0 0
    %191 = vmatpush1.bf16.msra.mxu0 0
    %192 = vmatprep.mubr.bf16.mxu0 0
    %193 = vmatmul.mubr.bf16.gmra.mrb[0].mxu0 %v104
    %v194 = vpop.f32.mrb[0].mxu0
    %v195 = vadd.f32 %v83, %v194
    %v196 = vpop.f32.mrb[0].mxu0
    %v197 = vadd.f32 %v87, %v196
    %v198 = vpop.f32.mrb[0].mxu0
    %v199 = vpop.f32.mrb[0].mxu0
    %200 = vdwg.mxu0
    %v201 = vmax.f32 %v154, 0.0
    %v202 = vmax.f32 %v156, 0.0
    %v203 = vmax.f32 %v195, 0.0
    %v204 = vmax.f32 %v197, 0.0
    %v205 = vpack.c.bf16 %v201, %v201
    %v206 = vpack.c.bf16 %v202, %v202
    %v207 = vpack.c.bf16 %v203, %v203
    %v208 = vpack.c.bf16 %v204, %v204
    %v209 = vld [vmem:[#allocation4] sm:$0xff]
    %v210 = vld [vmem:[#allocation4 + $0x8] sm:$0xf]
    %v211 = vld [vmem:[#allocation4 + $0xc] sm:$0xff]
    %v212 = vld [vmem:[#allocation4 + $0x14] sm:$0xf]
    %v213 = vld [vmem:[#allocation4 + $0x18] sm:$0xff]
    %v214 = vld [vmem:[#allocation4 + $0x20] sm:$0xf]
    %v215 = vld [vmem:[#allocation4 + $0x24] sm:$0xff]
    %v216 = vld [vmem:[#allocation4 + $0x2c] sm:$0xf]
    %v217 = vld [vmem:[#allocation4 + $0x30] sm:$0xff]
    %v218 = vld [vmem:[#allocation4 + $0x38] sm:$0xf]
    %v219 = vld [vmem:[#allocation4 + $0x3c] sm:$0xff]
    %v220 = vld [vmem:[#allocation4 + $0x44] sm:$0xf]
    %v221 = vld [vmem:[#allocation4 + $0x48] sm:$0xff]
    %v222 = vld [vmem:[#allocation4 + $0x50] sm:$0xf]
    %v223 = vld [vmem:[#allocation4 + $0x54] sm:$0xff]
    %v224 = vld [vmem:[#allocation4 + $0x5c] sm:$0xf]
    %v225 = vld [vmem:[#allocation4 + $0x60] sm:$0xff]
    %v226 = vld [vmem:[#allocation4 + $0x68] sm:$0xf]
    %v227 = vld [vmem:[#allocation4 + $0x6c] sm:$0xff]
    %v228 = vld [vmem:[#allocation4 + $0x74] sm:$0xf]
    %v229 = vld [vmem:[#allocation4 + $0x78] sm:$0xff]
    %v230 = vld [vmem:[#allocation4 + $0x80] sm:$0xf]
    %v231 = vld [vmem:[#allocation4 + $0x84] sm:$0xff]
    %v232 = vld [vmem:[#allocation4 + $0x8c] sm:$0xf]
    %v233 = vld [vmem:[#allocation4 + $0x90] sm:$0xff]
    %v234 = vld [vmem:[#allocation4 + $0x98] sm:$0xf]
    %v235 = vld [vmem:[#allocation4 + $0x9c] sm:$0xff]
    %v236 = vld [vmem:[#allocation4 + $0xa4] sm:$0xf]
    %v237 = vld [vmem:[#allocation4 + $0xa8] sm:$0xff]
    %v238 = vld [vmem:[#allocation4 + $0xb0] sm:$0xf]
    %v239 = vld [vmem:[#allocation4 + $0xb4] sm:$0xff]
    %v240 = vld [vmem:[#allocation4 + $0xbc] sm:$0xf]
    %v241 = vld [vmem:[#allocation4 + $0xc0] sm:$0xff]
    %v242 = vld [vmem:[#allocation4 + $0xc8] sm:$0xf]
    %v243 = vld [vmem:[#allocation4 + $0xcc] sm:$0xff]
    %v244 = vld [vmem:[#allocation4 + $0xd4] sm:$0xf]
    %v245 = vld [vmem:[#allocation4 + $0xd8] sm:$0xff]
    %v246 = vld [vmem:[#allocation4 + $0xe0] sm:$0xf]
    %v247 = vld [vmem:[#allocation4 + $0xe4] sm:$0xff]
    %v248 = vld [vmem:[#allocation4 + $0xec] sm:$0xf]
    %v249 = vld [vmem:[#allocation4 + $0xf0] sm:$0xff]
    %v250 = vld [vmem:[#allocation4 + $0xf8] sm:$0xf]
    %v251 = vld [vmem:[#allocation4 + $0xfc] sm:$0xff]
    %v252 = vld [vmem:[#allocation4 + $0x104] sm:$0xf]
    %v253 = vld [vmem:[#allocation4 + $0x108] sm:$0xff]
    %v254 = vld [vmem:[#allocation4 + $0x110] sm:$0xf]
    %v255 = vld [vmem:[#allocation4 + $0x114] sm:$0xff]
    %v256 = vld [vmem:[#allocation4 + $0x11c] sm:$0xf]
    %v257 = vld [vmem:[#allocation4 + $0x120] sm:$0xff]
    %v258 = vld [vmem:[#allocation4 + $0x128] sm:$0xf]
    %v259 = vld [vmem:[#allocation4 + $0x12c] sm:$0xff]
    %v260 = vld [vmem:[#allocation4 + $0x134] sm:$0xf]
    %v261 = vld [vmem:[#allocation4 + $0x138] sm:$0xff]
    %v262 = vld [vmem:[#allocation4 + $0x140] sm:$0xf]
    %v263 = vld [vmem:[#allocation4 + $0x144] sm:$0xff]
    %v264 = vld [vmem:[#allocation4 + $0x14c] sm:$0xf]
    %v265 = vld [vmem:[#allocation4 + $0x150] sm:$0xff]
    %v266 = vld [vmem:[#allocation4 + $0x158] sm:$0xf]
    %v267 = vld [vmem:[#allocation4 + $0x15c] sm:$0xff]
    %v268 = vld [vmem:[#allocation4 + $0x164] sm:$0xf]
    %v269 = vld [vmem:[#allocation4 + $0x168] sm:$0xff]
    %v270 = vld [vmem:[#allocation4 + $0x170] sm:$0xf]
    %v271 = vld [vmem:[#allocation4 + $0x174] sm:$0xff]
    %v272 = vld [vmem:[#allocation4 + $0x17c] sm:$0xf]
    %v273 = vld [vmem:[#allocation4 + $0x180] sm:$0xff]
    %v274 = vld [vmem:[#allocation4 + $0x188] sm:$0xf]
    %v275 = vld [vmem:[#allocation4 + $0x18c] sm:$0xff]
    %v276 = vld [vmem:[#allocation4 + $0x194] sm:$0xf]
    %v277 = vld [vmem:[#allocation4 + $0x198] sm:$0xff]
    %v278 = vld [vmem:[#allocation4 + $0x1a0] sm:$0xf]
    %v279 = vld [vmem:[#allocation4 + $0x1a4] sm:$0xff]
    %v280 = vld [vmem:[#allocation4 + $0x1ac] sm:$0xf]
    %v281 = vld [vmem:[#allocation4 + $0x1b0] sm:$0xff]
    %v282 = vld [vmem:[#allocation4 + $0x1b8] sm:$0xf]
    %v283 = vld [vmem:[#allocation4 + $0x1bc] sm:$0xff]
    %v284 = vld [vmem:[#allocation4 + $0x1c4] sm:$0xf]
    %v285 = vld [vmem:[#allocation4 + $0x1c8] sm:$0xff]
    %v286 = vld [vmem:[#allocation4 + $0x1d0] sm:$0xf]
    %v287 = vld [vmem:[#allocation4 + $0x1d4] sm:$0xff]
    %v288 = vld [vmem:[#allocation4 + $0x1dc] sm:$0xf]
    %v289 = vld [vmem:[#allocation4 + $0x1e0] sm:$0xff]
    %v290 = vld [vmem:[#allocation4 + $0x1e8] sm:$0xf]
    %v291 = vld [vmem:[#allocation4 + $0x1ec] sm:$0xff]
    %v292 = vld [vmem:[#allocation4 + $0x1f4] sm:$0xf]
    %v293 = vld [vmem:[#allocation4 + $0x1f8] sm:$0xff]
    %v294 = vld [vmem:[#allocation4 + $0x200] sm:$0xf]
    %v295 = vld [vmem:[#allocation4 + $0x204] sm:$0xff]
    %v296 = vld [vmem:[#allocation4 + $0x20c] sm:$0xf]
    %v297 = vld [vmem:[#allocation4 + $0x210] sm:$0xff]
    %v298 = vld [vmem:[#allocation4 + $0x218] sm:$0xf]
    %v299 = vld [vmem:[#allocation4 + $0x21c] sm:$0xff]
    %v300 = vld [vmem:[#allocation4 + $0x224] sm:$0xf]
    %v301 = vld [vmem:[#allocation4 + $0x228] sm:$0xff]
    %v302 = vld [vmem:[#allocation4 + $0x230] sm:$0xf]
    %v303 = vld [vmem:[#allocation4 + $0x234] sm:$0xff]
    %v304 = vld [vmem:[#allocation4 + $0x23c] sm:$0xf]
    %v305 = vld [vmem:[#allocation4 + $0x240] sm:$0xff]
    %v306 = vld [vmem:[#allocation4 + $0x248] sm:$0xf]
    %v307 = vld [vmem:[#allocation4 + $0x24c] sm:$0xff]
    %v308 = vld [vmem:[#allocation4 + $0x254] sm:$0xf]
    %v309 = vld [vmem:[#allocation4 + $0x258] sm:$0xff]
    %v310 = vld [vmem:[#allocation4 + $0x260] sm:$0xf]
    %v311 = vld [vmem:[#allocation4 + $0x264] sm:$0xff]
    %v312 = vld [vmem:[#allocation4 + $0x26c] sm:$0xf]
    %v313 = vld [vmem:[#allocation4 + $0x270] sm:$0xff]
    %v314 = vld [vmem:[#allocation4 + $0x278] sm:$0xf]
    %v315 = vld [vmem:[#allocation4 + $0x27c] sm:$0xff]
    %v316 = vld [vmem:[#allocation4 + $0x284] sm:$0xf]
    %v317 = vld [vmem:[#allocation4 + $0x288] sm:$0xff]
    %v318 = vld [vmem:[#allocation4 + $0x290] sm:$0xf]
    %v319 = vld [vmem:[#allocation4 + $0x294] sm:$0xff]
    %v320 = vld [vmem:[#allocation4 + $0x29c] sm:$0xf]
    %v321 = vld [vmem:[#allocation4 + $0x2a0] sm:$0xff]
    %v322 = vld [vmem:[#allocation4 + $0x2a8] sm:$0xf]
    %v323 = vld [vmem:[#allocation4 + $0x2ac] sm:$0xff]
    %v324 = vld [vmem:[#allocation4 + $0x2b4] sm:$0xf]
    %v325 = vld [vmem:[#allocation4 + $0x2b8] sm:$0xff]
    %v326 = vld [vmem:[#allocation4 + $0x2c0] sm:$0xf]
    %v327 = vld [vmem:[#allocation4 + $0x2c4] sm:$0xff]
    %v328 = vld [vmem:[#allocation4 + $0x2cc] sm:$0xf]
    %v329 = vld [vmem:[#allocation4 + $0x2d0] sm:$0xff]
    %v330 = vld [vmem:[#allocation4 + $0x2d8] sm:$0xf]
    %v331 = vld [vmem:[#allocation4 + $0x2dc] sm:$0xff]
    %v332 = vld [vmem:[#allocation4 + $0x2e4] sm:$0xf]
    %v333 = vld [vmem:[#allocation4 + $0x2e8] sm:$0xff]
    %v334 = vld [vmem:[#allocation4 + $0x2f0] sm:$0xf]
    %v335 = vld [vmem:[#allocation4 + $0x2f4] sm:$0xff]
    %v336 = vld [vmem:[#allocation4 + $0x2fc] sm:$0xf]
    %v337 = vld [vmem:[%s4] sm:$0x7]
    %v339 = vlaneseq
    %v340 = vshrl.u32 %v339, 7
    %v341 = vsub.s32 0, %v340
    %v342 = vrot.slane %v337, %v341
    %v343 = vlaneseq
    %v344 = vshrl.u32 %v343, 7
    %v345 = vsub.s32 1, %v344
    %v346 = vrot.slane %v337, %v345
    %v347 = vlaneseq
    %v348 = vshrl.u32 %v347, 7
    %v349 = vsub.s32 2, %v348
    %v350 = vrot.slane %v337, %v349
    %v482 = vunpack.c.l.b16 %v209
    %v483 = vunpack.c.h.b16 %v209
    %v484 = vunpack.c.l.b16 %v210
    %v485 = vunpack.c.l.b16 %v211
    %v486 = vunpack.c.h.b16 %v211
    %v487 = vunpack.c.l.b16 %v212
    %v488 = vunpack.c.l.b16 %v213
    %v489 = vunpack.c.h.b16 %v213
    %v490 = vunpack.c.l.b16 %v214
    %v491 = vunpack.c.l.b16 %v215
    %v492 = vunpack.c.h.b16 %v215
    %v493 = vunpack.c.l.b16 %v216
    %v494 = vunpack.c.l.b16 %v217
    %v495 = vunpack.c.h.b16 %v217
    %v496 = vunpack.c.l.b16 %v218
    %v497 = vunpack.c.l.b16 %v219
    %v498 = vunpack.c.h.b16 %v219
    %v499 = vunpack.c.l.b16 %v220
    %v500 = vunpack.c.l.b16 %v221
    %v501 = vunpack.c.h.b16 %v221
    %v502 = vunpack.c.l.b16 %v222
    %v503 = vunpack.c.l.b16 %v223
    %v504 = vunpack.c.h.b16 %v223
    %v505 = vunpack.c.l.b16 %v224
    %v506 = vunpack.c.l.b16 %v225
    %v507 = vunpack.c.h.b16 %v225
    %v508 = vunpack.c.l.b16 %v226
    %v509 = vunpack.c.l.b16 %v227
    %v510 = vunpack.c.h.b16 %v227
    %v511 = vunpack.c.l.b16 %v228
    %v512 = vunpack.c.l.b16 %v229
    %v513 = vunpack.c.h.b16 %v229
    %v514 = vunpack.c.l.b16 %v230
    %v515 = vunpack.c.l.b16 %v231
    %v516 = vunpack.c.h.b16 %v231
    %v517 = vunpack.c.l.b16 %v232
    %v518 = vunpack.c.l.b16 %v233
    %v519 = vunpack.c.h.b16 %v233
    %v520 = vunpack.c.l.b16 %v234
    %v521 = vunpack.c.l.b16 %v235
    %v522 = vunpack.c.h.b16 %v235
    %v523 = vunpack.c.l.b16 %v236
    %v524 = vunpack.c.l.b16 %v237
    %v525 = vunpack.c.h.b16 %v237
    %v526 = vunpack.c.l.b16 %v238
    %v527 = vunpack.c.l.b16 %v239
    %v528 = vunpack.c.h.b16 %v239
    %v529 = vunpack.c.l.b16 %v240
    %v530 = vunpack.c.l.b16 %v241
    %v531 = vunpack.c.h.b16 %v241
    %v532 = vunpack.c.l.b16 %v242
    %v533 = vunpack.c.l.b16 %v243
    %v534 = vunpack.c.h.b16 %v243
    %v535 = vunpack.c.l.b16 %v244
    %v536 = vunpack.c.l.b16 %v245
    %v537 = vunpack.c.h.b16 %v245
    %v538 = vunpack.c.l.b16 %v246
    %v539 = vunpack.c.l.b16 %v247
    %v540 = vunpack.c.h.b16 %v247
    %v541 = vunpack.c.l.b16 %v248
    %v542 = vunpack.c.l.b16 %v249
    %v543 = vunpack.c.h.b16 %v249
    %v544 = vunpack.c.l.b16 %v250
    %v545 = vunpack.c.l.b16 %v251
    %v546 = vunpack.c.h.b16 %v251
    %v547 = vunpack.c.l.b16 %v252
    %v548 = vunpack.c.l.b16 %v253
    %v549 = vunpack.c.h.b16 %v253
    %v550 = vunpack.c.l.b16 %v254
    %v551 = vunpack.c.l.b16 %v255
    %v552 = vunpack.c.h.b16 %v255
    %v553 = vunpack.c.l.b16 %v256
    %v554 = vunpack.c.l.b16 %v257
    %v555 = vunpack.c.h.b16 %v257
    %v556 = vunpack.c.l.b16 %v258
    %v557 = vunpack.c.l.b16 %v259
    %v558 = vunpack.c.h.b16 %v259
    %v559 = vunpack.c.l.b16 %v260
    %v560 = vunpack.c.l.b16 %v261
    %v561 = vunpack.c.h.b16 %v261
    %v562 = vunpack.c.l.b16 %v262
    %v563 = vunpack.c.l.b16 %v263
    %v564 = vunpack.c.h.b16 %v263
    %v565 = vunpack.c.l.b16 %v264
    %v566 = vunpack.c.l.b16 %v265
    %v567 = vunpack.c.h.b16 %v265
    %v568 = vunpack.c.l.b16 %v266
    %v569 = vunpack.c.l.b16 %v267
    %v570 = vunpack.c.h.b16 %v267
    %v571 = vunpack.c.l.b16 %v268
    %v572 = vunpack.c.l.b16 %v269
    %v573 = vunpack.c.h.b16 %v269
    %v574 = vunpack.c.l.b16 %v270
    %v575 = vunpack.c.l.b16 %v271
    %v576 = vunpack.c.h.b16 %v271
    %v577 = vunpack.c.l.b16 %v272
    %v578 = vunpack.c.l.b16 %v273
    %v579 = vunpack.c.h.b16 %v273
    %v580 = vunpack.c.l.b16 %v274
    %v581 = vunpack.c.l.b16 %v275
    %v582 = vunpack.c.h.b16 %v275
    %v583 = vunpack.c.l.b16 %v276
    %v584 = vunpack.c.l.b16 %v277
    %v585 = vunpack.c.h.b16 %v277
    %v586 = vunpack.c.l.b16 %v278
    %v587 = vunpack.c.l.b16 %v279
    %v588 = vunpack.c.h.b16 %v279
    %v589 = vunpack.c.l.b16 %v280
    %v590 = vunpack.c.l.b16 %v281
    %v591 = vunpack.c.h.b16 %v281
    %v592 = vunpack.c.l.b16 %v282
    %v593 = vunpack.c.l.b16 %v283
    %v594 = vunpack.c.h.b16 %v283
    %v595 = vunpack.c.l.b16 %v284
    %v596 = vunpack.c.l.b16 %v285
    %v597 = vunpack.c.h.b16 %v285
    %v598 = vunpack.c.l.b16 %v286
    %v599 = vunpack.c.l.b16 %v287
    %v600 = vunpack.c.h.b16 %v287
    %v601 = vunpack.c.l.b16 %v288
    %v602 = vunpack.c.l.b16 %v289
    %v603 = vunpack.c.h.b16 %v289
    %v604 = vunpack.c.l.b16 %v290
    %v605 = vunpack.c.l.b16 %v291
    %v606 = vunpack.c.h.b16 %v291
    %v607 = vunpack.c.l.b16 %v292
    %v608 = vunpack.c.l.b16 %v293
    %v609 = vunpack.c.h.b16 %v293
    %v610 = vunpack.c.l.b16 %v294
    %v611 = vunpack.c.l.b16 %v295
    %v612 = vunpack.c.h.b16 %v295
    %v613 = vunpack.c.l.b16 %v296
    %v614 = vunpack.c.l.b16 %v297
    %v615 = vunpack.c.h.b16 %v297
    %v616 = vunpack.c.l.b16 %v298
    %v617 = vunpack.c.l.b16 %v299
    %v618 = vunpack.c.h.b16 %v299
    %v619 = vunpack.c.l.b16 %v300
    %v620 = vunpack.c.l.b16 %v301
    %v621 = vunpack.c.h.b16 %v301
    %v622 = vunpack.c.l.b16 %v302
    %v623 = vunpack.c.l.b16 %v303
    %v624 = vunpack.c.h.b16 %v303
    %v625 = vunpack.c.l.b16 %v304
    %v626 = vunpack.c.l.b16 %v305
    %v627 = vunpack.c.h.b16 %v305
    %v628 = vunpack.c.l.b16 %v306
    %v629 = vunpack.c.l.b16 %v307
    %v630 = vunpack.c.h.b16 %v307
    %v631 = vunpack.c.l.b16 %v308
    %v632 = vunpack.c.l.b16 %v309
    %v633 = vunpack.c.h.b16 %v309
    %v634 = vunpack.c.l.b16 %v310
    %v635 = vunpack.c.l.b16 %v311
    %v636 = vunpack.c.h.b16 %v311
    %v637 = vunpack.c.l.b16 %v312
    %v638 = vunpack.c.l.b16 %v313
    %v639 = vunpack.c.h.b16 %v313
    %v640 = vunpack.c.l.b16 %v314
    %v641 = vunpack.c.l.b16 %v315
    %v642 = vunpack.c.h.b16 %v315
    %v643 = vunpack.c.l.b16 %v316
    %v644 = vunpack.c.l.b16 %v317
    %v645 = vunpack.c.h.b16 %v317
    %v646 = vunpack.c.l.b16 %v318
    %v647 = vunpack.c.l.b16 %v319
    %v648 = vunpack.c.h.b16 %v319
    %v649 = vunpack.c.l.b16 %v320
    %v650 = vunpack.c.l.b16 %v321
    %v651 = vunpack.c.h.b16 %v321
    %v652 = vunpack.c.l.b16 %v322
    %v653 = vunpack.c.l.b16 %v323
    %v654 = vunpack.c.h.b16 %v323
    %v655 = vunpack.c.l.b16 %v324
    %v656 = vunpack.c.l.b16 %v325
    %v657 = vunpack.c.h.b16 %v325
    %v658 = vunpack.c.l.b16 %v326
    %v659 = vunpack.c.l.b16 %v327
    %v660 = vunpack.c.h.b16 %v327
    %v661 = vunpack.c.l.b16 %v328
    %v662 = vunpack.c.l.b16 %v329
    %v663 = vunpack.c.h.b16 %v329
    %v664 = vunpack.c.l.b16 %v330
    %v665 = vunpack.c.l.b16 %v331
    %v666 = vunpack.c.h.b16 %v331
    %v667 = vunpack.c.l.b16 %v332
    %v668 = vunpack.c.l.b16 %v333
    %v669 = vunpack.c.h.b16 %v333
    %v670 = vunpack.c.l.b16 %v334
    %v671 = vunpack.c.l.b16 %v335
    %v672 = vunpack.c.h.b16 %v335
    %v673 = vunpack.c.l.b16 %v336
    %v674 = vpack.c.b16 %v485, %v482
    %v675 = vpack.c.b16 %v486, %v483
    %v676 = vpack.c.b16 %v487, %v484
    %v677 = vpack.c.b16 %v491, %v488
    %v678 = vpack.c.b16 %v492, %v489
    %v679 = vpack.c.b16 %v493, %v490
    %v680 = vpack.c.b16 %v497, %v494
    %v681 = vpack.c.b16 %v498, %v495
    %v682 = vpack.c.b16 %v499, %v496
    %v683 = vpack.c.b16 %v503, %v500
    %v684 = vpack.c.b16 %v504, %v501
    %v685 = vpack.c.b16 %v505, %v502
    %v686 = vpack.c.b16 %v509, %v506
    %v687 = vpack.c.b16 %v510, %v507
    %v688 = vpack.c.b16 %v511, %v508
    %v689 = vpack.c.b16 %v515, %v512
    %v690 = vpack.c.b16 %v516, %v513
    %v691 = vpack.c.b16 %v517, %v514
    %v692 = vpack.c.b16 %v521, %v518
    %v693 = vpack.c.b16 %v522, %v519
    %v694 = vpack.c.b16 %v523, %v520
    %v695 = vpack.c.b16 %v527, %v524
    %v696 = vpack.c.b16 %v528, %v525
    %v697 = vpack.c.b16 %v529, %v526
    %v698 = vpack.c.b16 %v533, %v530
    %v699 = vpack.c.b16 %v534, %v531
    %v700 = vpack.c.b16 %v535, %v532
    %v701 = vpack.c.b16 %v539, %v536
    %v702 = vpack.c.b16 %v540, %v537
    %v703 = vpack.c.b16 %v541, %v538
    %v704 = vpack.c.b16 %v545, %v542
    %v705 = vpack.c.b16 %v546, %v543
    %v706 = vpack.c.b16 %v547, %v544
    %v707 = vpack.c.b16 %v551, %v548
    %v708 = vpack.c.b16 %v552, %v549
    %v709 = vpack.c.b16 %v553, %v550
    %v710 = vpack.c.b16 %v557, %v554
    %v711 = vpack.c.b16 %v558, %v555
    %v712 = vpack.c.b16 %v559, %v556
    %v713 = vpack.c.b16 %v563, %v560
    %v714 = vpack.c.b16 %v564, %v561
    %v715 = vpack.c.b16 %v565, %v562
    %v716 = vpack.c.b16 %v569, %v566
    %v717 = vpack.c.b16 %v570, %v567
    %v718 = vpack.c.b16 %v571, %v568
    %v719 = vpack.c.b16 %v575, %v572
    %v720 = vpack.c.b16 %v576, %v573
    %v721 = vpack.c.b16 %v577, %v574
    %v722 = vpack.c.b16 %v581, %v578
    %v723 = vpack.c.b16 %v582, %v579
    %v724 = vpack.c.b16 %v583, %v580
    %v725 = vpack.c.b16 %v587, %v584
    %v726 = vpack.c.b16 %v588, %v585
    %v727 = vpack.c.b16 %v589, %v586
    %v728 = vpack.c.b16 %v593, %v590
    %v729 = vpack.c.b16 %v594, %v591
    %v730 = vpack.c.b16 %v595, %v592
    %v731 = vpack.c.b16 %v599, %v596
    %v732 = vpack.c.b16 %v600, %v597
    %v733 = vpack.c.b16 %v601, %v598
    %v734 = vpack.c.b16 %v605, %v602
    %v735 = vpack.c.b16 %v606, %v603
    %v736 = vpack.c.b16 %v607, %v604
    %v737 = vpack.c.b16 %v611, %v608
    %v738 = vpack.c.b16 %v612, %v609
    %v739 = vpack.c.b16 %v613, %v610
    %v740 = vpack.c.b16 %v617, %v614
    %v741 = vpack.c.b16 %v618, %v615
    %v742 = vpack.c.b16 %v619, %v616
    %v743 = vpack.c.b16 %v623, %v620
    %v744 = vpack.c.b16 %v624, %v621
    %v745 = vpack.c.b16 %v625, %v622
    %v746 = vpack.c.b16 %v629, %v626
    %v747 = vpack.c.b16 %v630, %v627
    %v748 = vpack.c.b16 %v631, %v628
    %v749 = vpack.c.b16 %v635, %v632
    %v750 = vpack.c.b16 %v636, %v633
    %v751 = vpack.c.b16 %v637, %v634
    %v752 = vpack.c.b16 %v641, %v638
    %v753 = vpack.c.b16 %v642, %v639
    %v754 = vpack.c.b16 %v643, %v640
    %v755 = vpack.c.b16 %v647, %v644
    %v756 = vpack.c.b16 %v648, %v645
    %v757 = vpack.c.b16 %v649, %v646
    %v758 = vpack.c.b16 %v653, %v650
    %v759 = vpack.c.b16 %v654, %v651
    %v760 = vpack.c.b16 %v655, %v652
    %v761 = vpack.c.b16 %v659, %v656
    %v762 = vpack.c.b16 %v660, %v657
    %v763 = vpack.c.b16 %v661, %v658
    %v764 = vpack.c.b16 %v665, %v662
    %v765 = vpack.c.b16 %v666, %v663
    %v766 = vpack.c.b16 %v667, %v664
    %v767 = vpack.c.b16 %v671, %v668
    %v768 = vpack.c.b16 %v672, %v669
    %v769 = vpack.c.b16 %v673, %v670
    %866 = vmatprep.subr.bf16.mxu0 %v675
    %867 = vmatpush1.bf16.msra.mxu0 %v674
    %868 = vmatprep.subr.bf16.mxu0 %v678
    %869 = vmatpush1.bf16.msra.mxu0 %v677
    %870 = vmatprep.subr.bf16.mxu0 %v681
    %871 = vmatpush1.bf16.msra.mxu0 %v680
    %872 = vmatprep.subr.bf16.mxu0 %v684
    %873 = vmatpush1.bf16.msra.mxu0 %v683
    %874 = vmatprep.subr.bf16.mxu0 %v687
    %875 = vmatpush1.bf16.msra.mxu0 %v686
    %876 = vmatprep.subr.bf16.mxu0 %v690
    %877 = vmatpush1.bf16.msra.mxu0 %v689
    %878 = vmatprep.subr.bf16.mxu0 %v693
    %879 = vmatpush1.bf16.msra.mxu0 %v692
    %880 = vmatprep.subr.bf16.mxu0 %v696
    %881 = vmatpush1.bf16.msra.mxu0 %v695
    %882 = vmatprep.subr.bf16.mxu0 %v699
    %883 = vmatpush1.bf16.msra.mxu0 %v698
    %884 = vmatprep.subr.bf16.mxu0 %v702
    %885 = vmatpush1.bf16.msra.mxu0 %v701
    %886 = vmatprep.subr.bf16.mxu0 %v705
    %887 = vmatpush1.bf16.msra.mxu0 %v704
    %888 = vmatprep.subr.bf16.mxu0 %v708
    %889 = vmatpush1.bf16.msra.mxu0 %v707
    %890 = vmatprep.subr.bf16.mxu0 %v711
    %891 = vmatpush1.bf16.msra.mxu0 %v710
    %892 = vmatprep.subr.bf16.mxu0 %v714
    %893 = vmatpush1.bf16.msra.mxu0 %v713
    %894 = vmatprep.subr.bf16.mxu0 %v717
    %895 = vmatpush1.bf16.msra.mxu0 %v716
    %896 = vmatprep.subr.bf16.mxu0 %v720
    %897 = vmatpush1.bf16.msra.mxu0 %v719
    %898 = vmatprep.mubr.bf16.mxu0 %v206
    %899 = vmatmul.mubr.bf16.gmra.mrb[0].mxu0 %v205
    %v900 = vpop.f32.mrb[0].mxu0
    %v901 = vadd.f32 %v342, %v900
    %v902 = vpop.f32.mrb[0].mxu0
    %v903 = vadd.f32 %v346, %v902
    %v904 = vpop.f32.mrb[0].mxu0
    %v905 = vpop.f32.mrb[0].mxu0
    %906 = vdwg.mxu0
    %907 = vmatprep.subr.bf16.mxu0 %v723
    %908 = vmatpush1.bf16.msra.mxu0 %v722
    %909 = vmatprep.subr.bf16.mxu0 %v726
    %910 = vmatpush1.bf16.msra.mxu0 %v725
    %911 = vmatprep.subr.bf16.mxu0 %v729
    %912 = vmatpush1.bf16.msra.mxu0 %v728
    %913 = vmatprep.subr.bf16.mxu0 %v732
    %914 = vmatpush1.bf16.msra.mxu0 %v731
    %915 = vmatprep.subr.bf16.mxu0 %v735
    %916 = vmatpush1.bf16.msra.mxu0 %v734
    %917 = vmatprep.subr.bf16.mxu0 %v738
    %918 = vmatpush1.bf16.msra.mxu0 %v737
    %919 = vmatprep.subr.bf16.mxu0 %v741
    %920 = vmatpush1.bf16.msra.mxu0 %v740
    %921 = vmatprep.subr.bf16.mxu0 %v744
    %922 = vmatpush1.bf16.msra.mxu0 %v743
    %923 = vmatprep.subr.bf16.mxu0 %v747
    %924 = vmatpush1.bf16.msra.mxu0 %v746
    %925 = vmatprep.subr.bf16.mxu0 %v750
    %926 = vmatpush1.bf16.msra.mxu0 %v749
    %927 = vmatprep.subr.bf16.mxu0 %v753
    %928 = vmatpush1.bf16.msra.mxu0 %v752
    %929 = vmatprep.subr.bf16.mxu0 %v756
    %930 = vmatpush1.bf16.msra.mxu0 %v755
    %931 = vmatprep.subr.bf16.mxu0 %v759
    %932 = vmatpush1.bf16.msra.mxu0 %v758
    %933 = vmatprep.subr.bf16.mxu0 %v762
    %934 = vmatpush1.bf16.msra.mxu0 %v761
    %935 = vmatprep.subr.bf16.mxu0 %v765
    %936 = vmatpush1.bf16.msra.mxu0 %v764
    %937 = vmatprep.subr.bf16.mxu0 %v768
    %938 = vmatpush1.bf16.msra.mxu0 %v767
    %939 = vmatprep.mubr.bf16.mxu0 %v208
    %940 = vmatmul.mubr.bf16.gmra.mrb[0].mxu0 %v207
    %v941 = vpop.f32.mrb[0].mxu0
    %v942 = vadd.f32 %v901, %v941
    %v943 = vpop.f32.mrb[0].mxu0
    %v944 = vadd.f32 %v903, %v943
    %v945 = vpop.f32.mrb[0].mxu0
    %v946 = vpop.f32.mrb[0].mxu0
    %947 = vdwg.mxu0
    %948 = vmatprep.subr.bf16.mxu0 0
    %949 = vmatpush1.bf16.msra.mxu0 %v676
    %950 = vmatprep.subr.bf16.mxu0 0
    %951 = vmatpush1.bf16.msra.mxu0 %v679
    %952 = vmatprep.subr.bf16.mxu0 0
    %953 = vmatpush1.bf16.msra.mxu0 %v682
    %954 = vmatprep.subr.bf16.mxu0 0
    %955 = vmatpush1.bf16.msra.mxu0 %v685
    %956 = vmatprep.subr.bf16.mxu0 0
    %957 = vmatpush1.bf16.msra.mxu0 %v688
    %958 = vmatprep.subr.bf16.mxu0 0
    %959 = vmatpush1.bf16.msra.mxu0 %v691
    %960 = vmatprep.subr.bf16.mxu0 0
    %961 = vmatpush1.bf16.msra.mxu0 %v694
    %962 = vmatprep.subr.bf16.mxu0 0
    %963 = vmatpush1.bf16.msra.mxu0 %v697
    %964 = vmatprep.subr.bf16.mxu0 0
    %965 = vmatpush1.bf16.msra.mxu0 %v700
    %966 = vmatprep.subr.bf16.mxu0 0
    %967 = vmatpush1.bf16.msra.mxu0 %v703
    %968 = vmatprep.subr.bf16.mxu0 0
    %969 = vmatpush1.bf16.msra.mxu0 %v706
    %970 = vmatprep.subr.bf16.mxu0 0
    %971 = vmatpush1.bf16.msra.mxu0 %v709
    %972 = vmatprep.subr.bf16.mxu0 0
    %973 = vmatpush1.bf16.msra.mxu0 %v712
    %974 = vmatprep.subr.bf16.mxu0 0
    %975 = vmatpush1.bf16.msra.mxu0 %v715
    %976 = vmatprep.subr.bf16.mxu0 0
    %977 = vmatpush1.bf16.msra.mxu0 %v718
    %978 = vmatprep.subr.bf16.mxu0 0
    %979 = vmatpush1.bf16.msra.mxu0 %v721
    %980 = vmatprep.mubr.bf16.mxu0 %v206
    %981 = vmatmul.mubr.bf16.gmra.mrb[0].mxu0 %v205
    %v982 = vpop.f32.mrb[0].mxu0
    %v983 = vadd.f32 %v350, %v982
    %v984 = vpop.f32.mrb[0].mxu0
    %v985 = vpop.f32.mrb[0].mxu0
    %v986 = vpop.f32.mrb[0].mxu0
    %987 = vdwg.mxu0
    %988 = vmatprep.subr.bf16.mxu0 0
    %989 = vmatpush1.bf16.msra.mxu0 %v724
    %990 = vmatprep.subr.bf16.mxu0 0
    %991 = vmatpush1.bf16.msra.mxu0 %v727
    %992 = vmatprep.subr.bf16.mxu0 0
    %993 = vmatpush1.bf16.msra.mxu0 %v730
    %994 = vmatprep.subr.bf16.mxu0 0
    %995 = vmatpush1.bf16.msra.mxu0 %v733
    %996 = vmatprep.subr.bf16.mxu0 0
    %997 = vmatpush1.bf16.msra.mxu0 %v736
    %998 = vmatprep.subr.bf16.mxu0 0
    %999 = vmatpush1.bf16.msra.mxu0 %v739
    %1000 = vmatprep.subr.bf16.mxu0 0
    %1001 = vmatpush1.bf16.msra.mxu0 %v742
    %1002 = vmatprep.subr.bf16.mxu0 0
    %1003 = vmatpush1.bf16.msra.mxu0 %v745
    %1004 = vmatprep.subr.bf16.mxu0 0
    %1005 = vmatpush1.bf16.msra.mxu0 %v748
    %1006 = vmatprep.subr.bf16.mxu0 0
    %1007 = vmatpush1.bf16.msra.mxu0 %v751
    %1008 = vmatprep.subr.bf16.mxu0 0
    %1009 = vmatpush1.bf16.msra.mxu0 %v754
    %1010 = vmatprep.subr.bf16.mxu0 0
    %1011 = vmatpush1.bf16.msra.mxu0 %v757
    %1012 = vmatprep.subr.bf16.mxu0 0
    %1013 = vmatpush1.bf16.msra.mxu0 %v760
    %1014 = vmatprep.subr.bf16.mxu0 0
    %1015 = vmatpush1.bf16.msra.mxu0 %v763
    %1016 = vmatprep.subr.bf16.mxu0 0
    %1017 = vmatpush1.bf16.msra.mxu0 %v766
    %1018 = vmatprep.subr.bf16.mxu0 0
    %1019 = vmatpush1.bf16.msra.mxu0 %v769
    %1020 = vmatprep.mubr.bf16.mxu0 %v208
    %1021 = vmatmul.mubr.bf16.gmra.mrb[0].mxu0 %v207
    %v1022 = vpop.f32.mrb[0].mxu0
    %v1023 = vadd.f32 %v983, %v1022
    %v1024 = vpop.f32.mrb[0].mxu0
    %v1025 = vpop.f32.mrb[0].mxu0
    %v1026 = vpop.f32.mrb[0].mxu0
    %1027 = vdwg.mxu0
    %v1028 = vmax.f32 %v942, 0.0
    %v1029 = vmax.f32 %v944, 0.0
    %v1030 = vmax.f32 %v1023, 0.0
    %v1031 = vpack.c.bf16 %v1028, %v1028
    %v1032 = vpack.c.bf16 %v1029, %v1029
    %v1033 = vpack.c.bf16 %v1030, %v1030
    %v1034 = vld [vmem:[#allocation6] sm:$0xf]
    %v1035 = vld [vmem:[#allocation6 + $0x4] sm:$0xf]
    %v1036 = vld [vmem:[#allocation6 + $0x8] sm:$0xf]
    %v1037 = vld [vmem:[#allocation6 + $0xc] sm:$0xf]
    %v1038 = vld [vmem:[#allocation6 + $0x10] sm:$0xf]
    %v1039 = vld [vmem:[#allocation6 + $0x14] sm:$0xf]
    %v1040 = vld [vmem:[#allocation6 + $0x18] sm:$0xf]
    %v1041 = vld [vmem:[#allocation6 + $0x1c] sm:$0xf]
    %v1042 = vld [vmem:[#allocation6 + $0x20] sm:$0xf]
    %v1043 = vld [vmem:[#allocation6 + $0x24] sm:$0xf]
    %v1044 = vld [vmem:[#allocation6 + $0x28] sm:$0xf]
    %v1045 = vld [vmem:[#allocation6 + $0x2c] sm:$0xf]
    %v1046 = vld [vmem:[#allocation6 + $0x30] sm:$0xf]
    %v1047 = vld [vmem:[#allocation6 + $0x34] sm:$0xf]
    %v1048 = vld [vmem:[#allocation6 + $0x38] sm:$0xf]
    %v1049 = vld [vmem:[#allocation6 + $0x3c] sm:$0xf]
    %v1050 = vld [vmem:[#allocation6 + $0x40] sm:$0xf]
    %v1051 = vld [vmem:[#allocation6 + $0x44] sm:$0xf]
    %v1052 = vld [vmem:[#allocation6 + $0x48] sm:$0xf]
    %v1053 = vld [vmem:[#allocation6 + $0x4c] sm:$0xf]
    %v1054 = vld [vmem:[#allocation6 + $0x50] sm:$0xf]
    %v1055 = vld [vmem:[#allocation6 + $0x54] sm:$0xf]
    %v1056 = vld [vmem:[#allocation6 + $0x58] sm:$0xf]
    %v1057 = vld [vmem:[#allocation6 + $0x5c] sm:$0xf]
    %v1058 = vld [vmem:[#allocation6 + $0x60] sm:$0xf]
    %v1059 = vld [vmem:[#allocation6 + $0x64] sm:$0xf]
    %v1060 = vld [vmem:[#allocation6 + $0x68] sm:$0xf]
    %v1061 = vld [vmem:[#allocation6 + $0x6c] sm:$0xf]
    %v1062 = vld [vmem:[#allocation6 + $0x70] sm:$0xf]
    %v1063 = vld [vmem:[#allocation6 + $0x74] sm:$0xf]
    %v1064 = vld [vmem:[#allocation6 + $0x78] sm:$0xf]
    %v1065 = vld [vmem:[#allocation6 + $0x7c] sm:$0xf]
    %v1066 = vld [vmem:[#allocation6 + $0x80] sm:$0xf]
    %v1067 = vld [vmem:[#allocation6 + $0x84] sm:$0xf]
    %v1068 = vld [vmem:[#allocation6 + $0x88] sm:$0xf]
    %v1069 = vld [vmem:[#allocation6 + $0x8c] sm:$0xf]
    %v1070 = vld [vmem:[#allocation6 + $0x90] sm:$0xf]
    %v1071 = vld [vmem:[#allocation6 + $0x94] sm:$0xf]
    %v1072 = vld [vmem:[#allocation6 + $0x98] sm:$0xf]
    %v1073 = vld [vmem:[#allocation6 + $0x9c] sm:$0xf]
    %v1074 = vld [vmem:[#allocation6 + $0xa0] sm:$0xf]
    %v1075 = vld [vmem:[#allocation6 + $0xa4] sm:$0xf]
    %v1076 = vld [vmem:[#allocation6 + $0xa8] sm:$0xf]
    %v1077 = vld [vmem:[#allocation6 + $0xac] sm:$0xf]
    %v1078 = vld [vmem:[#allocation6 + $0xb0] sm:$0xf]
    %v1079 = vld [vmem:[#allocation6 + $0xb4] sm:$0xf]
    %v1080 = vld [vmem:[#allocation6 + $0xb8] sm:$0xf]
    %v1081 = vld [vmem:[#allocation6 + $0xbc] sm:$0xf]
    %v1082 = vld [vmem:[%s6] sm:$0x1]
    %v1084 = vlaneseq
    %v1085 = vshrl.u32 %v1084, 7
    %v1086 = vsub.s32 0, %v1085
    %v1087 = vrot.slane %v1082, %v1086
    %v1137 = vunpack.c.l.b16 %v1034
    %v1138 = vunpack.c.l.b16 %v1035
    %v1139 = vunpack.c.l.b16 %v1036
    %v1140 = vunpack.c.l.b16 %v1037
    %v1141 = vunpack.c.l.b16 %v1038
    %v1142 = vunpack.c.l.b16 %v1039
    %v1143 = vunpack.c.l.b16 %v1040
    %v1144 = vunpack.c.l.b16 %v1041
    %v1145 = vunpack.c.l.b16 %v1042
    %v1146 = vunpack.c.l.b16 %v1043
    %v1147 = vunpack.c.l.b16 %v1044
    %v1148 = vunpack.c.l.b16 %v1045
    %v1149 = vunpack.c.l.b16 %v1046
    %v1150 = vunpack.c.l.b16 %v1047
    %v1151 = vunpack.c.l.b16 %v1048
    %v1152 = vunpack.c.l.b16 %v1049
    %v1153 = vunpack.c.l.b16 %v1050
    %v1154 = vunpack.c.l.b16 %v1051
    %v1155 = vunpack.c.l.b16 %v1052
    %v1156 = vunpack.c.l.b16 %v1053
    %v1157 = vunpack.c.l.b16 %v1054
    %v1158 = vunpack.c.l.b16 %v1055
    %v1159 = vunpack.c.l.b16 %v1056
    %v1160 = vunpack.c.l.b16 %v1057
    %v1161 = vunpack.c.l.b16 %v1058
    %v1162 = vunpack.c.l.b16 %v1059
    %v1163 = vunpack.c.l.b16 %v1060
    %v1164 = vunpack.c.l.b16 %v1061
    %v1165 = vunpack.c.l.b16 %v1062
    %v1166 = vunpack.c.l.b16 %v1063
    %v1167 = vunpack.c.l.b16 %v1064
    %v1168 = vunpack.c.l.b16 %v1065
    %v1169 = vunpack.c.l.b16 %v1066
    %v1170 = vunpack.c.l.b16 %v1067
    %v1171 = vunpack.c.l.b16 %v1068
    %v1172 = vunpack.c.l.b16 %v1069
    %v1173 = vunpack.c.l.b16 %v1070
    %v1174 = vunpack.c.l.b16 %v1071
    %v1175 = vunpack.c.l.b16 %v1072
    %v1176 = vunpack.c.l.b16 %v1073
    %v1177 = vunpack.c.l.b16 %v1074
    %v1178 = vunpack.c.l.b16 %v1075
    %v1179 = vunpack.c.l.b16 %v1076
    %v1180 = vunpack.c.l.b16 %v1077
    %v1181 = vunpack.c.l.b16 %v1078
    %v1182 = vunpack.c.l.b16 %v1079
    %v1183 = vunpack.c.l.b16 %v1080
    %v1184 = vunpack.c.l.b16 %v1081
    %v1185 = vpack.c.b16 %v1138, %v1137
    %v1186 = vpack.c.b16 %v1140, %v1139
    %v1187 = vpack.c.b16 %v1142, %v1141
    %v1188 = vpack.c.b16 %v1144, %v1143
    %v1189 = vpack.c.b16 %v1146, %v1145
    %v1190 = vpack.c.b16 %v1148, %v1147
    %v1191 = vpack.c.b16 %v1150, %v1149
    %v1192 = vpack.c.b16 %v1152, %v1151
    %v1193 = vpack.c.b16 %v1154, %v1153
    %v1194 = vpack.c.b16 %v1156, %v1155
    %v1195 = vpack.c.b16 %v1158, %v1157
    %v1196 = vpack.c.b16 %v1160, %v1159
    %v1197 = vpack.c.b16 %v1162, %v1161
    %v1198 = vpack.c.b16 %v1164, %v1163
    %v1199 = vpack.c.b16 %v1166, %v1165
    %v1200 = vpack.c.b16 %v1168, %v1167
    %v1201 = vpack.c.b16 %v1170, %v1169
    %v1202 = vpack.c.b16 %v1172, %v1171
    %v1203 = vpack.c.b16 %v1174, %v1173
    %v1204 = vpack.c.b16 %v1176, %v1175
    %v1205 = vpack.c.b16 %v1178, %v1177
    %v1206 = vpack.c.b16 %v1180, %v1179
    %v1207 = vpack.c.b16 %v1182, %v1181
    %v1208 = vpack.c.b16 %v1184, %v1183
    %1233 = vmatprep.subr.bf16.mxu0 0
    %1234 = vmatpush1.bf16.msra.mxu0 %v1185
    %1235 = vmatprep.subr.bf16.mxu0 0
    %1236 = vmatpush1.bf16.msra.mxu0 %v1186
    %1237 = vmatprep.subr.bf16.mxu0 0
    %1238 = vmatpush1.bf16.msra.mxu0 %v1187
    %1239 = vmatprep.subr.bf16.mxu0 0
    %1240 = vmatpush1.bf16.msra.mxu0 %v1188
    %1241 = vmatprep.subr.bf16.mxu0 0
    %1242 = vmatpush1.bf16.msra.mxu0 %v1189
    %1243 = vmatprep.subr.bf16.mxu0 0
    %1244 = vmatpush1.bf16.msra.mxu0 %v1190
    %1245 = vmatprep.subr.bf16.mxu0 0
    %1246 = vmatpush1.bf16.msra.mxu0 %v1191
    %1247 = vmatprep.subr.bf16.mxu0 0
    %1248 = vmatpush1.bf16.msra.mxu0 %v1192
    %1249 = vmatprep.subr.bf16.mxu0 0
    %1250 = vmatpush1.bf16.msra.mxu0 %v1193
    %1251 = vmatprep.subr.bf16.mxu0 0
    %1252 = vmatpush1.bf16.msra.mxu0 %v1194
    %1253 = vmatprep.subr.bf16.mxu0 0
    %1254 = vmatpush1.bf16.msra.mxu0 %v1195
    %1255 = vmatprep.subr.bf16.mxu0 0
    %1256 = vmatpush1.bf16.msra.mxu0 %v1196
    %1257 = vmatprep.subr.bf16.mxu0 0
    %1258 = vmatpush1.bf16.msra.mxu0 %v1197
    %1259 = vmatprep.subr.bf16.mxu0 0
    %1260 = vmatpush1.bf16.msra.mxu0 %v1198
    %1261 = vmatprep.subr.bf16.mxu0 0
    %1262 = vmatpush1.bf16.msra.mxu0 %v1199
    %1263 = vmatprep.subr.bf16.mxu0 0
    %1264 = vmatpush1.bf16.msra.mxu0 %v1200
    %1265 = vmatprep.mubr.bf16.mxu0 %v1032
    %1266 = vmatmul.mubr.bf16.gmra.mrb[0].mxu0 %v1031
    %v1267 = vpop.f32.mrb[0].mxu0
    %v1268 = vadd.f32 %v1087, %v1267
    %v1269 = vpop.f32.mrb[0].mxu0
    %v1270 = vpop.f32.mrb[0].mxu0
    %v1271 = vpop.f32.mrb[0].mxu0
    %1272 = vdwg.mxu0
    %1273 = vmatprep.subr.bf16.mxu0 0
    %1274 = vmatpush1.bf16.msra.mxu0 %v1201
    %1275 = vmatprep.subr.bf16.mxu0 0
    %1276 = vmatpush1.bf16.msra.mxu0 %v1202
    %1277 = vmatprep.subr.bf16.mxu0 0
    %1278 = vmatpush1.bf16.msra.mxu0 %v1203
    %1279 = vmatprep.subr.bf16.mxu0 0
    %1280 = vmatpush1.bf16.msra.mxu0 %v1204
    %1281 = vmatprep.subr.bf16.mxu0 0
    %1282 = vmatpush1.bf16.msra.mxu0 %v1205
    %1283 = vmatprep.subr.bf16.mxu0 0
    %1284 = vmatpush1.bf16.msra.mxu0 %v1206
    %1285 = vmatprep.subr.bf16.mxu0 0
    %1286 = vmatpush1.bf16.msra.mxu0 %v1207
    %1287 = vmatprep.subr.bf16.mxu0 0
    %1288 = vmatpush1.bf16.msra.mxu0 %v1208
    %1289 = vmatprep.subr.bf16.mxu0 0
    %1290 = vmatpush1.bf16.msra.mxu0 0
    %1291 = vmatprep.subr.bf16.mxu0 0
    %1292 = vmatpush1.bf16.msra.mxu0 0
    %1293 = vmatprep.subr.bf16.mxu0 0
    %1294 = vmatpush1.bf16.msra.mxu0 0
    %1295 = vmatprep.subr.bf16.mxu0 0
    %1296 = vmatpush1.bf16.msra.mxu0 0
    %1297 = vmatprep.subr.bf16.mxu0 0
    %1298 = vmatpush1.bf16.msra.mxu0 0
    %1299 = vmatprep.subr.bf16.mxu0 0
    %1300 = vmatpush1.bf16.msra.mxu0 0
    %1301 = vmatprep.subr.bf16.mxu0 0
    %1302 = vmatpush1.bf16.msra.mxu0 0
    %1303 = vmatprep.subr.bf16.mxu0 0
    %1304 = vmatpush1.bf16.msra.mxu0 0
    %1305 = vmatprep.mubr.bf16.mxu0 0
    %1306 = vmatmul.mubr.bf16.gmra.mrb[0].mxu0 %v1033
    %v1307 = vpop.f32.mrb[0].mxu0
    %v1308 = vadd.f32 %v1268, %v1307
    %v1309 = vpop.f32.mrb[0].mxu0
    %v1310 = vpop.f32.mrb[0].mxu0
    %v1311 = vpop.f32.mrb[0].mxu0
    %1312 = vdwg.mxu0
    %v1313 = vtanh.pop %v1308
    %1314 = vst [vmem:[%s7] sm:$0xff] %v1313
    // Predicated region
    $region42: #{actor_forward.1} parent=1 // pred_check
      _
    $region43: #{actor_forward.1} parent=1 // pred_check_branch
      %1316 = sbr.rel (0) target = $region45
    $region44: #{actor_forward.1} parent=1 // pred_region
      _
    $region45: #{actor_forward.1} parent=1 // pred_fallthru
      _
    // Predicated region
    $region46: #{actor_forward.1} parent=1 // pred_check
      _
    $region47: #{actor_forward.1} parent=1 // pred_check_branch
      %1318 = sbr.rel (0) target = $region49
    $region48: #{actor_forward.1} parent=1 // pred_region
      _
    $region49: #{actor_forward.1} parent=1 // pred_fallthru
      _
    %1319 = vsyncpa [#allocation3], 1
    %1320 = vsyncpa [#allocation5], 1

</llo_original>
